<compile_context>
chip_gen: v7x
topology: tpu7x:2x2x1
jax: 0.10.0
libtpu: 0.0.40
codegen_flags: <defaults>
</compile_context>

<pallas_src>
import functools

import numpy as np
import jax
import jax.numpy as jnp
from jax import lax
from jax.experimental import pallas as pl
from jax.experimental.pallas import tpu as pltpu


# ---------------------------------------------------------------------------
# Host-side constant builders (baked in as a tiny VMEM operand of the matmul).
# ---------------------------------------------------------------------------

def _build_freq(dim, base):
    """PyTorch buffer: freq[m] = base ** (-(start + 2m)/dim), start = -dim//2."""
    start = -dim // 2
    exps = np.arange(start, start + dim, 2, dtype=np.int64).astype(np.float64)
    return (1.0 / np.power(float(base), exps / float(dim))).astype(np.float32)


def _packed_gmat(freq, dim, group):
    """[group*3, 128]; lane l = position (l // dim) of the group, rotary index l % dim."""
    half = dim // 2
    g = np.zeros((group * 3, 128), np.float32)
    for l in range(128):
        j = l // dim
        m = (l % dim) % half
        g[j * 3 + (m % 3), l] = freq[m]
    return g


def _dedup_fmat(freq, half):
    """[3, half]; F[c, m] = freq[m] iff m % 3 == c."""
    f = np.zeros((3, half), np.float32)
    m = np.arange(half)
    f[m % 3, m] = freq[m]
    return f


def _padded_fmat(freq, dim, padded):
    """[3, padded]; duplicated halves baked in, zero padding lanes (sliced off on host)."""
    half = dim // 2
    f = np.zeros((3, padded), np.float32)
    k = np.arange(dim)
    m = k % half
    f[m % 3, k] = freq[m]
    return f


# ---------------------------------------------------------------------------
# Kernels.
# ---------------------------------------------------------------------------

def _rope3d_full_kernel(pos_ref, g_ref, cos_ref, sin_ref):
    """emb = pos @ G on the MXU, then cos/sin over the full output width.

    pos_ref : [1, TR, K] int32,  g_ref : [K, W] f32,  cos/sin_ref : [1, TR, W].
    precision=HIGHEST is required: the default MXU pass truncates f32 operands
    toward bf16 and would corrupt large position ids / the freq table.
    """
    pos = pos_ref[0].astype(jnp.float32)
    emb = jnp.dot(pos, g_ref[...],
                  precision=lax.Precision.HIGHEST,
                  preferred_element_type=jnp.float32)
    # TODO(synk): a shared sin/cos range reduction (one mod-2pi + two polynomials)
    # could cut more VALU work on v5e; deferred until a bundle profile shows the
    # transcendental slot saturated.
    cos_ref[0] = jnp.cos(emb).astype(cos_ref.dtype)
    sin_ref[0] = jnp.sin(emb).astype(sin_ref.dtype)


def _rope3d_dedup_kernel(pos_ref, f_ref, cos_ref, sin_ref, *, half):
    """Wide path with half % 128 == 0: cos/sin evaluated once on the half width and
    stored to both 128-lane-aligned halves (no concatenate, lane-dense stores)."""
    pos = pos_ref[0].astype(jnp.float32)
    freqs = jnp.dot(pos, f_ref[...],
                    precision=lax.Precision.HIGHEST,
                    preferred_element_type=jnp.float32)
    cos_h = jnp.cos(freqs).astype(cos_ref.dtype)
    sin_h = jnp.sin(freqs).astype(sin_ref.dtype)
    cos_ref[0, :, pl.ds(0, half)] = cos_h
    cos_ref[0, :, pl.ds(half, half)] = cos_h
    sin_ref[0, :, pl.ds(0, half)] = sin_h
    sin_ref[0, :, pl.ds(half, half)] = sin_h


# ---------------------------------------------------------------------------
# Tiling helpers.
# ---------------------------------------------------------------------------

def _pick_tile_rows(total, limit, quantum=8):
    """Largest divisor of `total` that is <= limit and a multiple of `quantum`;
    falling back to the full extent (always a legal block shape)."""
    limit = max(1, min(total, limit))
    for d in range(limit, 0, -1):
        if total % d == 0 and d % quantum == 0:
            return d
    return total


class RotaryEmbedding3D:
    """JAX/Pallas port of the PyTorch RotaryEmbedding3D module (forward only)."""

    def __init__(self, dim, base=10000):
        assert dim % 2 == 0, "rotary dim must be even"
        self.dim = dim
        self.base = base
        self.start = -dim // 2
        self.expand_rate = int(np.ceil(dim // 2 / 3.0))
        self._freq_np = _build_freq(dim, base)          # host copy, baked into G/F
        self.freq = jnp.asarray(self._freq_np)          # exposed like the torch buffer

    def __call__(self, x, position_ids, seq_len=None):
        # seq_len is deprecated/unused in the reference module.
        del seq_len
        bs, seq, three = position_ids.shape
        assert three == 3, "position_ids must be [bs, seq, 3]"
        dim = self.dim
        half = dim // 2
        out_dtype = x.dtype
        itemsize = jnp.dtype(out_dtype).itemsize
        pos = position_ids.astype(jnp.int32)

        packed = (dim <= 128) and (128 % dim == 0) and ((seq * dim) % 128 == 0)
        dedup = (not packed) and (half % 128 == 0)

        if packed:
            group = 128 // dim                       # positions packed per 128-lane row
            rows_total = seq // group
            k_in = group * 3
            w_out = 128
            gmat = _packed_gmat(self._freq_np, dim, group)
            pos_dev = pos.reshape(bs, rows_total, k_in)      # contiguous -> free
            kernel = _rope3d_full_kernel
        elif dedup:
            rows_total = seq
            k_in = 3
            w_out = dim
            gmat = _dedup_fmat(self._freq_np, half)          # [3, half]
            pos_dev = pos
            kernel = functools.partial(_rope3d_dedup_kernel, half=half)
        else:
            rows_total = seq
            k_in = 3
            w_out = ((dim + 127) // 128) * 128               # lane-dense padded stores
            gmat = _padded_fmat(self._freq_np, dim, w_out)
            pos_dev = pos
            kernel = _rope3d_full_kernel

        # VMEM accounting per row: double-buffered in + 2 outs, plus f32 temps
        # (emb + f32 cos/sin before the cast).  Keep the tile under ~40 MiB so it
        # is safe on v7x's 64 MiB VMEM as well as v5e/v6e.
        bytes_per_row = 2 * (k_in * 4 + 2 * w_out * itemsize) + 3 * w_out * 4
        tile_budget = 40 * 1024 * 1024
        limit = min(4096, max(8, tile_budget // max(1, bytes_per_row)))
        if bs == 1 and rows_total >= 16:
            # Keep >= 2 grid steps so both v7x TensorCores get work.
            limit = min(limit, max(8, rows_total // 2))
        tr = _pick_tile_rows(rows_total, limit)
        grid = (bs, rows_total // tr)

        est = tr * bytes_per_row + 2 * gmat.size * 4 + (2 << 20)
        vmem_limit = int(min(48 * 1024 * 1024, max(32 * 1024 * 1024, est)))

        g_dev = jnp.asarray(gmat)
        gk, gw = gmat.shape

        cos_d, sin_d = pl.pallas_call(
            kernel,
            out_shape=(
                jax.ShapeDtypeStruct((bs, rows_total, w_out), out_dtype),
                jax.ShapeDtypeStruct((bs, rows_total, w_out), out_dtype),
            ),
            grid_spec=pltpu.PrefetchScalarGridSpec(
                num_scalar_prefetch=0,
                grid=grid,
                in_specs=[
                    pl.BlockSpec((1, tr, k_in), lambda b, s: (b, s, 0)),
                    pl.BlockSpec((gk, gw), lambda b, s: (0, 0)),   # constant G/F table
                ],
                out_specs=[
                    pl.BlockSpec((1, tr, w_out), lambda b, s: (b, s, 0)),
                    pl.BlockSpec((1, tr, w_out), lambda b, s: (b, s, 0)),
                ],
            ),
            compiler_params=pltpu.CompilerParams(
                dimension_semantics=("parallel", "parallel"),
                vmem_limit_bytes=vmem_limit,
            ),
        )(pos_dev, g_dev)

        if packed:
            cos = cos_d.reshape(bs, seq, dim)   # contiguous reshape -> free
            sin = sin_d.reshape(bs, seq, dim)
        elif w_out != dim:
            cos = cos_d[:, :, :dim]             # drop the lane padding
            sin = sin_d[:, :, :dim]
        else:
            cos, sin = cos_d, sin_d
        return cos, sin


# ---------------------------------------------------------------------------
# Pure-JAX reference (mirrors the PyTorch forward) and self-test.
# ---------------------------------------------------------------------------

def _reference(freq, position_ids, dim, x_dtype):
    half = dim // 2
    idx = jnp.arange(half, dtype=jnp.int32) % 3
    pos_exp = jnp.take(position_ids, idx, axis=2).astype(jnp.float32)   # [bs, seq, half]
    freqs = pos_exp * freq[None, None, :].astype(jnp.float32)
    emb = jnp.concatenate([freqs, freqs], axis=-1)
    return jnp.cos(emb).astype(x_dtype), jnp.sin(emb).astype(x_dtype)


def _run_case(key, bs, num_heads, seq, dim, max_pos, dtype, atol):
    k1, k2 = jax.random.split(key)
    x = jax.random.normal(k1, (bs, num_heads, seq, dim), dtype=jnp.float32).astype(dtype)
    position_ids = jax.random.randint(k2, (bs, seq, 3), minval=0, maxval=max_pos,
                                      dtype=jnp.int32)
    rope = RotaryEmbedding3D(dim)
    cos, sin = rope(x, position_ids)
    cos = jax.block_until_ready(cos)
    sin = jax.block_until_ready(sin)

    assert cos.shape == (bs, seq, dim) and sin.shape == (bs, seq, dim)
    assert cos.dtype == dtype and sin.dtype == dtype

    ref_cos, ref_sin = _reference(rope.freq, position_ids, dim, dtype)
    np.testing.assert_allclose(np.asarray(cos, dtype=np.float32),
                               np.asarray(ref_cos, dtype=np.float32), rtol=0.0, atol=atol)
    np.testing.assert_allclose(np.asarray(sin, dtype=np.float32),
                               np.asarray(ref_sin, dtype=np.float32), rtol=0.0, atol=atol)


if __name__ == "__main__":
    key = jax.random.PRNGKey(0)
    ka, kb, kc = jax.random.split(key, 3)

    # Packed path: dim=32 -> 4 positions per 128-lane row, f32 outputs.
    _run_case(ka, bs=2, num_heads=4, seq=64, dim=32, max_pos=16,
              dtype=jnp.float32, atol=2e-3)

    # Wide dedup path: dim=256 (half=128), bf16 outputs (exercises the dtype cast).
    _run_case(kb, bs=2, num_heads=2, seq=64, dim=256, max_pos=16,
              dtype=jnp.bfloat16, atol=1e-2)

    # Wide padded path: dim=96 padded to 128 lanes on device, bs=1 (2-TC split check).
    _run_case(kc, bs=1, num_heads=2, seq=64, dim=96, max_pos=16,
              dtype=jnp.float32, atol=2e-3)

    print("KERNEL_OK")
</pallas_src>

<mosaic_0001>
module attributes {stable_mosaic.version = 11 : i64} {
  func.func @_rope3d_full_kernel(%arg0: i32, %arg1: i32, %arg2: memref<1x16x12xi32, #tpu.memory_space<vmem>>, %arg3: memref<12x128xf32, #tpu.memory_space<vmem>>, %arg4: memref<1x16x128xf32, #tpu.memory_space<vmem>>, %arg5: memref<1x16x128xf32, #tpu.memory_space<vmem>>) attributes {dimension_semantics = [#tpu.dimension_semantics<parallel>, #tpu.dimension_semantics<parallel>], iteration_bounds = array<i64: 2, 1>, scalar_prefetch = 0 : i64, scratch_operands = 0 : i64, tpu.core_type = #tpu.core_type<tc>, window_params = [{transform_indices = @transform_0, window_bounds = array<i64: 1, 16, 12>}, {pipeline_mode = #tpu.pipeline_mode<synchronous>, transform_indices = @transform_1, window_bounds = array<i64: 12, 128>}, {transform_indices = @transform_2, window_bounds = array<i64: 1, 16, 128>}, {transform_indices = @transform_3, window_bounds = array<i64: 1, 16, 128>}]} {
    %c0 = arith.constant 0 : index
    %c0_0 = arith.constant 0 : index
    %c0_1 = arith.constant 0 : index
    %0 = vector.load %arg2[%c0, %c0_0, %c0_1] : memref<1x16x12xi32, #tpu.memory_space<vmem>>, vector<1x16x12xi32>
    %1 = vector.shape_cast %0 : vector<1x16x12xi32> to vector<16x12xi32>
    %2 = arith.sitofp %1 : vector<16x12xi32> to vector<16x12xf32>
    %c0_2 = arith.constant 0 : index
    %c0_3 = arith.constant 0 : index
    %3 = vector.load %arg3[%c0_2, %c0_3] : memref<12x128xf32, #tpu.memory_space<vmem>>, vector<12x128xf32>
    %cst = arith.constant dense<0.000000e+00> : vector<16x128xf32>
    %4 = tpu.matmul %2, %3, %cst {dimension_numbers = #tpu.dot_dimension_numbers<[1], [0], [0], [1], [0, 0, 1, 1], [], []>, precision = #tpu.contract_precision<fp32>} : vector<16x12xf32>, vector<12x128xf32>, vector<16x128xf32> -> vector<16x128xf32>
    %5 = math.cos %4 : vector<16x128xf32>
    %c0_4 = arith.constant 0 : index
    %c0_5 = arith.constant 0 : index
    %c0_6 = arith.constant 0 : index
    %6 = vector.load %arg4[%c0_4, %c0_5, %c0_6] : memref<1x16x128xf32, #tpu.memory_space<vmem>>, vector<1x16x128xf32>
    %7 = vector.shape_cast %6 : vector<1x16x128xf32> to vector<16x128xf32>
    %8 = vector.shape_cast %5 : vector<16x128xf32> to vector<1x16x128xf32>
    tpu.vector_store %arg4[%c0_4, %c0_5, %c0_6], %8 {strides = array<i32>} : memref<1x16x128xf32, #tpu.memory_space<vmem>>, vector<1x16x128xf32>,
    %9 = math.sin %4 : vector<16x128xf32>
    %c0_7 = arith.constant 0 : index
    %c0_8 = arith.constant 0 : index
    %c0_9 = arith.constant 0 : index
    %10 = vector.load %arg5[%c0_7, %c0_8, %c0_9] : memref<1x16x128xf32, #tpu.memory_space<vmem>>, vector<1x16x128xf32>
    %11 = vector.shape_cast %10 : vector<1x16x128xf32> to vector<16x128xf32>
    %12 = vector.shape_cast %9 : vector<16x128xf32> to vector<1x16x128xf32>
    tpu.vector_store %arg5[%c0_7, %c0_8, %c0_9], %12 {strides = array<i32>} : memref<1x16x128xf32, #tpu.memory_space<vmem>>, vector<1x16x128xf32>,
    return
  }
  func.func @transform_0(%arg0: i32, %arg1: i32) -> (i32, i32, i32) {
    %c0_i32 = arith.constant 0 : i32
    %c0_i32_0 = arith.constant 0 : i32
    return %arg0, %arg1, %c0_i32 : i32, i32, i32
  }
  func.func @transform_1(%arg0: i32, %arg1: i32) -> (i32, i32) {
    %c0_i32 = arith.constant 0 : i32
    %c0_i32_0 = arith.constant 0 : i32
    %c0_i32_1 = arith.constant 0 : i32
    return %c0_i32, %c0_i32_0 : i32, i32
  }
  func.func @transform_2(%arg0: i32, %arg1: i32) -> (i32, i32, i32) {
    %c0_i32 = arith.constant 0 : i32
    %c0_i32_0 = arith.constant 0 : i32
    return %arg0, %arg1, %c0_i32 : i32, i32, i32
  }
  func.func @transform_3(%arg0: i32, %arg1: i32) -> (i32, i32, i32) {
    %c0_i32 = arith.constant 0 : i32
    %c0_i32_0 = arith.constant 0 : i32
    return %arg0, %arg1, %c0_i32 : i32, i32, i32
  }
}

</mosaic_0001>

<llo_original>
// kernel: tpu_custom_call.1
$region0: #{tpu_custom_call.1}
  #allocation0 [shape = 'u32[]', space=smem, size = 0x4, offset = 0x4, fixed_abs, tag = 'smem constant byte address 0x4 - core index']
  #allocation1 [shape = 'u32[144,128]{1,0:T(1,128)}', space=vmem, size = 0x12000, scoped, tag = 'internal scratch']
  %s0 = inlined_call_operand.vmem [shape: s32[2,16,12], index: 0, kind: input, shape index: {}]
  %s1 = inlined_call_operand.vmem [shape: f32[12,128], index: 1, kind: input, shape index: {}]
  %s2 = inlined_call_operand.hbm [shape: f32[2,16,128], index: 2, kind: output, shape index: {0}]
  %s3 = inlined_call_operand.hbm [shape: f32[2,16,128], index: 3, kind: output, shape index: {1}]
  %4 = xla_tuple %s2, %s3
  %s5 = sld [smem:[#allocation0]]
  $region49: #{tpu_custom_call.1} parent=0
    _
  %s7 = ssub.s32 1, %s5
  %s8 = scalar_select 0, %s7, %s5
  $region1: #{tpu_custom_call.1} parent=0
    #allocation2 [shape = 'u8[16384]{0}', space=vmem, size = 0x4000, scoped, tag = 'output window, operand 0']
    #allocation3 [shape = 's32[2]{0}', space=sflag, size = 0x8, scoped, tag = 'scoped memory for tpu_custom_call.1']
    #allocation4 [shape = 'u8[16384]{0}', space=vmem, size = 0x4000, scoped, tag = 'output window, operand 1']
    #allocation5 [shape = 's32[2]{0}', space=sflag, size = 0x8, scoped, tag = 'scoped memory for tpu_custom_call.1']
    %9 = vsyncpa [#allocation3], 0
    %s10 = scalar_lea.sflag [#allocation3], 1
    %11 = vsyncpa %s10, 0
    %12 = vsyncpa [#allocation5], 0
    %s13 = scalar_lea.sflag [#allocation5], 1
    %14 = vsyncpa %s13, 0
    loop: start=0, step=1, limit=4
    $region2: #{tpu_custom_call.1} parent=1 // loop_pre_header
      _
    $region3: #{tpu_custom_call.1} parent=1 // loop_header
      %s16 = sphi 0, %s20
      %p17 = scmp.ge.s32.totalorder %s16, 4
      %s23 = sphi 0, %s35
      %s24 = sphi 0, %s31
      %s25 = sphi 0, %s23
      %s26 = sphi 0, %s24
      %s27 = sphi 0, %s25
      %s28 = sphi 0, %s26
      %s40 = sphi 0, %s42
      %s43 = sphi 0, %s40
      %s44 = sphi 0, %s43
      %s60 = sphi 0, %s44
      %s64 = sphi 0, %s64
      %s66 = sphi 0, %s64
      %s67 = sphi 0, %s66
      %s81 = sphi 0, %s67
      %s89 = sphi 0, %s91
      %s92 = sphi 0, %s89
      %s93 = sphi 0, %s92
      %s109 = sphi 0, %s93
      %s117 = sphi 0, %s119
      %s120 = sphi 0, %s117
      %s121 = sphi 0, %s120
      %s137 = sphi 0, %s121
    $region4: #{tpu_custom_call.1} parent=1 // loop_header_branch
      %19 = sbr.rel (%p17) target = $region8
    $region5: #{tpu_custom_call.1} parent=1 // loop_body
      %s21 = ssub.s32 %s16, 1
      %s22 = ssub.s32 %s16, 2
      %s29 = sadd.s32 1, %s24
      %p30 = scmp.ge.s32.totalorder %s29, 1
      %s31 = scalar_select %p30, 0, %s29
      %s32 = sadd.s32 1, %s23
      %s33 = scalar_select %p30, %s32, %s23
      %p34 = scmp.ge.s32.totalorder %s33, 2
      %s35 = scalar_select %p34, 0, %s33
      %s36 = ssub.s32 %s23, %s35
      %s37 = ssub.s32 %s24, %s31
      %s38 = sor.u32 %s36, %s37
      %p39 = scmp.eq.s32.totalorder %s38, 0
      %s41 = sadd.s32 %s40, 1
      %s42 = scalar_select %p39, %s40, %s41
      %p45 = pneg %p39
      %p46 = scmp.eq.s32.totalorder %s16, 1
      %p47 = por %p45, %p46
      %p48 = scmp.ne.s32.totalorder %s40, %s43
      %p49 = scmp.eq.s32.totalorder %s16, 0
      %p50 = por %p48, %p49
      %p51 = scmp.ne.s32.totalorder %s40, %s43
      %p52 = scmp.eq.s32.totalorder %s21, 1
      %p53 = por %p51, %p52
      %p54 = scmp.ne.s32.totalorder %s43, %s44
      %p55 = scmp.eq.s32.totalorder %s21, 0
      %p56 = por %p54, %p55
      %p57 = scmp.ne.s32.totalorder %s43, %s44
      %p58 = scmp.eq.s32.totalorder %s22, 1
      %p59 = por %p57, %p58
      %p61 = scmp.ne.s32.totalorder %s44, %s60
      %p62 = scmp.eq.s32.totalorder %s22, 0
      %p63 = por %p61, %p62
      %s65 = sadd.s32 %s64, 1
      %p68 = scmp.eq.s32.totalorder %s16, 1
      %p69 = scmp.ne.s32.totalorder %s64, %s66
      %p70 = scmp.eq.s32.totalorder %s16, 0
      %p71 = por %p69, %p70
      %p72 = scmp.ne.s32.totalorder %s64, %s66
      %p73 = scmp.eq.s32.totalorder %s21, 1
      %p74 = por %p72, %p73
      %p75 = scmp.ne.s32.totalorder %s66, %s67
      %p76 = scmp.eq.s32.totalorder %s21, 0
      %p77 = por %p75, %p76
      %p78 = scmp.ne.s32.totalorder %s66, %s67
      %p79 = scmp.eq.s32.totalorder %s22, 1
      %p80 = por %p78, %p79
      %p82 = scmp.ne.s32.totalorder %s67, %s81
      %p83 = scmp.eq.s32.totalorder %s22, 0
      %p84 = por %p82, %p83
      %s85 = ssub.s32 %s23, %s35
      %s86 = ssub.s32 %s24, %s31
      %s87 = sor.u32 %s85, %s86
      %p88 = scmp.eq.s32.totalorder %s87, 0
      %s90 = sadd.s32 %s89, 1
      %s91 = scalar_select %p88, %s89, %s90
      %p94 = pneg %p88
      %p95 = scmp.eq.s32.totalorder %s16, 1
      %p96 = por %p94, %p95
      %p97 = scmp.ne.s32.totalorder %s89, %s92
      %p98 = scmp.eq.s32.totalorder %s16, 0
      %p99 = por %p97, %p98
      %p100 = scmp.ne.s32.totalorder %s89, %s92
      %p101 = scmp.eq.s32.totalorder %s21, 1
      %p102 = por %p100, %p101
      %p103 = scmp.ne.s32.totalorder %s92, %s93
      %p104 = scmp.eq.s32.totalorder %s21, 0
      %p105 = por %p103, %p104
      %p106 = scmp.ne.s32.totalorder %s92, %s93
      %p107 = scmp.eq.s32.totalorder %s22, 1
      %p108 = por %p106, %p107
      %p110 = scmp.ne.s32.totalorder %s93, %s109
      %p111 = scmp.eq.s32.totalorder %s22, 0
      %p112 = por %p110, %p111
      %s113 = ssub.s32 %s23, %s35
      %s114 = ssub.s32 %s24, %s31
      %s115 = sor.u32 %s113, %s114
      %p116 = scmp.eq.s32.totalorder %s115, 0
      %s118 = sadd.s32 %s117, 1
      %s119 = scalar_select %p116, %s117, %s118
      %p122 = pneg %p116
      %p123 = scmp.eq.s32.totalorder %s16, 1
      %p124 = por %p122, %p123
      %p125 = scmp.ne.s32.totalorder %s117, %s120
      %p126 = scmp.eq.s32.totalorder %s16, 0
      %p127 = por %p125, %p126
      %p128 = scmp.ne.s32.totalorder %s117, %s120
      %p129 = scmp.eq.s32.totalorder %s21, 1
      %p130 = por %p128, %p129
      %p131 = scmp.ne.s32.totalorder %s120, %s121
      %p132 = scmp.eq.s32.totalorder %s21, 0
      %p133 = por %p131, %p132
      %p134 = scmp.ne.s32.totalorder %s120, %s121
      %p135 = scmp.eq.s32.totalorder %s22, 1
      %p136 = por %p134, %p135
      %p138 = scmp.ne.s32.totalorder %s121, %s137
      %p139 = scmp.eq.s32.totalorder %s22, 0
      %p140 = por %p138, %p139
      %p141 = scmp.le.s32.totalorder 1, %s16
      %p142 = scmp.lt.s32.totalorder %s16, 3
      %p143 = pnand %p141, %p142
      %p144 = pneg %p143
      // Predicated region
      $region9: #{tpu_custom_call.1} parent=5 // pred_check
        _
      $region10: #{tpu_custom_call.1} parent=5 // pred_check_branch
        %146 = sbr.rel (%p143) target = $region12
      $region11: #{tpu_custom_call.1} parent=5 // pred_region
        %s147 = ssub.s32 %s16, 1
        // Predicated region
        $region13: #{tpu_custom_call.1} parent=11 // pred_check
          %p148 = pneg %p77
        $region14: #{tpu_custom_call.1} parent=11 // pred_check_branch
          %150 = sbr.rel (%p148) target = $region16
        $region15: #{tpu_custom_call.1} parent=11 // pred_region
          _
        $region16: #{tpu_custom_call.1} parent=11 // pred_fallthru
          _
      $region12: #{tpu_custom_call.1} parent=5 // pred_fallthru
        _
      %p151 = scmp.lt.s32.totalorder %s16, 2
      // Predicated region
      $region17: #{tpu_custom_call.1} parent=5 // pred_check
        %p152 = pneg %p151
      $region18: #{tpu_custom_call.1} parent=5 // pred_check_branch
        %154 = sbr.rel (%p152) target = $region20
      $region19: #{tpu_custom_call.1} parent=5 // pred_region
        // Predicated region
        $region21: #{tpu_custom_call.1} parent=19 // pred_check
          %p155 = pneg %p50
        $region22: #{tpu_custom_call.1} parent=19 // pred_check_branch
          %157 = sbr.rel (%p155) target = $region24
        $region23: #{tpu_custom_call.1} parent=19 // pred_region
          %s158 = smul.u32 2, %s24
          %p159 = scmp.lt.s32.totalorder %s23, 1
          %s160 = scalar_select %p159, %s23, 1
          %p161 = scmp.lt.s32.totalorder %s158, 1
          %s162 = scalar_select %p161, %s158, 1
          %s163 = smul.addr %s160, 2
          %s164 = sadd.s32 %s162, %s163
          %s165 = smul.addr %s164, 8
          %s166 = scalar_lea.vmem %s0, %s165
          %s167 = smul.u32 2, %s24
        $region24: #{tpu_custom_call.1} parent=19 // pred_fallthru
          _
      $region20: #{tpu_custom_call.1} parent=5 // pred_fallthru
        _
      %p168 = scmp.le.s32.totalorder 1, %s16
      %p169 = scmp.lt.s32.totalorder %s16, 3
      %p170 = pnand %p168, %p169
      %p171 = pneg %p170
      // Predicated region
      $region25: #{tpu_custom_call.1} parent=5 // pred_check
        _
      $region26: #{tpu_custom_call.1} parent=5 // pred_check_branch
        %173 = sbr.rel (%p170) target = $region28
      $region27: #{tpu_custom_call.1} parent=5 // pred_region
        %s174 = ssub.s32 %s16, 1
        %s175 = smul.u32 2, %s26
        %p176 = scmp.lt.s32.totalorder %s25, 1
        %s177 = scalar_select %p176, %s25, 1
        %p178 = scmp.lt.s32.totalorder %s175, 1
        %s179 = scalar_select %p178, %s175, 1
        %s180 = smul.addr %s177, 2
        %s181 = sadd.s32 %s179, %s180
        %s182 = smul.addr %s181, 8
        %s183 = scalar_lea.vmem %s0, %s182
        %p184 = pneg %p56
        %p185 = pneg %p53
        %p186 = pneg %p77
        %p187 = pneg %p74
        %p188 = pneg %p105
        %p189 = pneg %p102
        %s190 = sand.u32 %s92, 1
        %s191 = scalar_lea.sflag [#allocation3], %s190
        %s192 = sand.u32 %s92, 1
        %s193 = smul.addr %s192, 16
        %s194 = scalar_lea.vmem [#allocation2], %s193
        %p195 = pneg %p133
        %p196 = pneg %p130
        %s197 = sand.u32 %s120, 1
        %s198 = scalar_lea.sflag [#allocation5], %s197
        %s199 = sand.u32 %s120, 1
        %s200 = smul.addr %s199, 16
        %s201 = scalar_lea.vmem [#allocation4], %s200
        %s202 = smul.u32 2, %s26
        %p203 = scmp.lt.s32.totalorder %s25, 1
        %s204 = scalar_select %p203, %s25, 1
        %p205 = scmp.lt.s32.totalorder %s202, 1
        %s206 = scalar_select %p205, %s202, 1
        %s207 = smul.addr %s204, 2
        %s208 = sadd.s32 %s206, %s207
        %s209 = smul.addr %s208, 8
        %s210 = scalar_lea.vmem %s0, %s209
        %s211 = smul.u32 2, %s26
        %s212 = smul.u32 2, %s26
        %s213 = smul.u32 2, %s26
        %v214 = vld [vmem:[%s210] sm:$0xff]
        %v215 = vld [vmem:[%s210 + $0x8] sm:$0xff]
        %v216 = vcvt.s32.f32 %v214
        %v217 = vcvt.s32.f32 %v215
        %v218 = vld [vmem:[%s1] sm:$0xff]
        %v219 = vld [vmem:[%s1 + $0x8] sm:$0xf]
        %vm220 = vcmask 97280
        %v222 = vsel %vm220, %v216, 0
        %v225 = vsel %vm220, %v217, 0
        %vm227 = vcmask 1043456
        %v229 = vsel %vm227, %v219, 0
        %231 = vmatprep.subr.mxu0 0.0
        %v232 = vand.u32 %v218, 4294901760
        %233 = vmatpush1.msra.mxu0 %v232
        %234 = vmatprep.subr.mxu0 0.0
        %v235 = vand.u32 %v229, 4294901760
        %236 = vmatpush1.msra.mxu0 %v235
        %237 = vmatprep.subr.mxu0 0.0
        %238 = vmatpush1.msra.mxu0 0.0
        %239 = vmatprep.subr.mxu0 0.0
        %240 = vmatpush1.msra.mxu0 0.0
        %241 = vmatprep.subr.mxu0 0.0
        %242 = vmatpush1.msra.mxu0 0.0
        %243 = vmatprep.subr.mxu0 0.0
        %244 = vmatpush1.msra.mxu0 0.0
        %245 = vmatprep.subr.mxu0 0.0
        %246 = vmatpush1.msra.mxu0 0.0
        %247 = vmatprep.subr.mxu0 0.0
        %248 = vmatpush1.msra.mxu0 0.0
        %249 = vmatprep.subr.mxu0 0.0
        %250 = vmatpush1.msra.mxu0 0.0
        %251 = vmatprep.subr.mxu0 0.0
        %252 = vmatpush1.msra.mxu0 0.0
        %253 = vmatprep.subr.mxu0 0.0
        %254 = vmatpush1.msra.mxu0 0.0
        %255 = vmatprep.subr.mxu0 0.0
        %256 = vmatpush1.msra.mxu0 0.0
        %257 = vmatprep.subr.mxu0 0.0
        %258 = vmatpush1.msra.mxu0 0.0
        %259 = vmatprep.subr.mxu0 0.0
        %260 = vmatpush1.msra.mxu0 0.0
        %261 = vmatprep.subr.mxu0 0.0
        %262 = vmatpush1.msra.mxu0 0.0
        %263 = vmatprep.subr.mxu0 0.0
        %264 = vmatpush1.msra.mxu0 0.0
        %265 = vmatprep.subr.mxu0 0.0
        %266 = vmatpush1.msra.mxu0 0.0
        %267 = vmatprep.subr.mxu0 0.0
        %268 = vmatpush1.msra.mxu0 0.0
        %269 = vmatprep.subr.mxu0 0.0
        %270 = vmatpush1.msra.mxu0 0.0
        %271 = vmatprep.subr.mxu0 0.0
        %272 = vmatpush1.msra.mxu0 0.0
        %273 = vmatprep.subr.mxu0 0.0
        %274 = vmatpush1.msra.mxu0 0.0
        %275 = vmatprep.subr.mxu0 0.0
        %276 = vmatpush1.msra.mxu0 0.0
        %277 = vmatprep.subr.mxu0 0.0
        %278 = vmatpush1.msra.mxu0 0.0
        %279 = vmatprep.subr.mxu0 0.0
        %280 = vmatpush1.msra.mxu0 0.0
        %281 = vmatprep.subr.mxu0 0.0
        %282 = vmatpush1.msra.mxu0 0.0
        %283 = vmatprep.subr.mxu0 0.0
        %284 = vmatpush1.msra.mxu0 0.0
        %285 = vmatprep.subr.mxu0 0.0
        %286 = vmatpush1.msra.mxu0 0.0
        %287 = vmatprep.subr.mxu0 0.0
        %288 = vmatpush1.msra.mxu0 0.0
        %289 = vmatprep.subr.mxu0 0.0
        %290 = vmatpush1.msra.mxu0 0.0
        %291 = vmatprep.subr.mxu0 0.0
        %292 = vmatpush1.msra.mxu0 0.0
        %293 = vmatprep.subr.mxu0 0.0
        %294 = vmatpush1.msra.mxu0 0.0
        %295 = vmatprep.subr.mxu0 0.0
        %296 = vmatpush1.msra.mxu0 0.0
        %297 = vmatprep.mubr.f32.mxu0 0.0
        %v298 = vand.u32 %v222, 4294901760
        %v299 = vsub.f32 %v222, %v298
        %v300 = vand.u32 %v299, 4294901760
        %v301 = vsub.f32 %v299, %v300
        %v302 = vand.u32 %v301, 4294901760
        %303 = vmatmul.mubr.f32.gmra.mrb[0].mxu0 %v302
        %v304 = vpop.f32.mrb[0].mxu0
        %v305 = vadd.f32 0.0, %v304
        %v306 = vpop.f32.mrb[0].mxu0
        %307 = vmatprep.mubr.f32.mxu0 0.0
        %v308 = vand.u32 %v225, 4294901760
        %v309 = vsub.f32 %v225, %v308
        %v310 = vand.u32 %v309, 4294901760
        %v311 = vsub.f32 %v309, %v310
        %v312 = vand.u32 %v311, 4294901760
        %313 = vmatmul.mubr.f32.gmra.mrb[0].mxu0 %v312
        %v314 = vpop.f32.mrb[0].mxu0
        %v315 = vadd.f32 0.0, %v314
        %v316 = vpop.f32.mrb[0].mxu0
        %317 = vdwg.mxu0
        %318 = vmatprep.subr.mxu0 0.0
        %v319 = vand.u32 %v218, 4294901760
        %v320 = vsub.f32 %v218, %v319
        %v321 = vand.u32 %v320, 4294901760
        %v322 = vsub.f32 %v320, %v321
        %v323 = vand.u32 %v322, 4294901760
        %324 = vmatpush1.msra.mxu0 %v323
        %325 = vmatprep.subr.mxu0 0.0
        %v326 = vand.u32 %v229, 4294901760
        %v327 = vsub.f32 %v229, %v326
        %v328 = vand.u32 %v327, 4294901760
        %v329 = vsub.f32 %v327, %v328
        %v330 = vand.u32 %v329, 4294901760
        %331 = vmatpush1.msra.mxu0 %v330
        %332 = vmatprep.subr.mxu0 0.0
        %333 = vmatpush1.msra.mxu0 0.0
        %334 = vmatprep.subr.mxu0 0.0
        %335 = vmatpush1.msra.mxu0 0.0
        %336 = vmatprep.subr.mxu0 0.0
        %337 = vmatpush1.msra.mxu0 0.0
        %338 = vmatprep.subr.mxu0 0.0
        %339 = vmatpush1.msra.mxu0 0.0
        %340 = vmatprep.subr.mxu0 0.0
        %341 = vmatpush1.msra.mxu0 0.0
        %342 = vmatprep.subr.mxu0 0.0
        %343 = vmatpush1.msra.mxu0 0.0
        %344 = vmatprep.subr.mxu0 0.0
        %345 = vmatpush1.msra.mxu0 0.0
        %346 = vmatprep.subr.mxu0 0.0
        %347 = vmatpush1.msra.mxu0 0.0
        %348 = vmatprep.subr.mxu0 0.0
        %349 = vmatpush1.msra.mxu0 0.0
        %350 = vmatprep.subr.mxu0 0.0
        %351 = vmatpush1.msra.mxu0 0.0
        %352 = vmatprep.subr.mxu0 0.0
        %353 = vmatpush1.msra.mxu0 0.0
        %354 = vmatprep.subr.mxu0 0.0
        %355 = vmatpush1.msra.mxu0 0.0
        %356 = vmatprep.subr.mxu0 0.0
        %357 = vmatpush1.msra.mxu0 0.0
        %358 = vmatprep.subr.mxu0 0.0
        %359 = vmatpush1.msra.mxu0 0.0
        %360 = vmatprep.subr.mxu0 0.0
        %361 = vmatpush1.msra.mxu0 0.0
        %362 = vmatprep.subr.mxu0 0.0
        %363 = vmatpush1.msra.mxu0 0.0
        %364 = vmatprep.subr.mxu0 0.0
        %365 = vmatpush1.msra.mxu0 0.0
        %366 = vmatprep.subr.mxu0 0.0
        %367 = vmatpush1.msra.mxu0 0.0
        %368 = vmatprep.subr.mxu0 0.0
        %369 = vmatpush1.msra.mxu0 0.0
        %370 = vmatprep.subr.mxu0 0.0
        %371 = vmatpush1.msra.mxu0 0.0
        %372 = vmatprep.subr.mxu0 0.0
        %373 = vmatpush1.msra.mxu0 0.0
        %374 = vmatprep.subr.mxu0 0.0
        %375 = vmatpush1.msra.mxu0 0.0
        %376 = vmatprep.subr.mxu0 0.0
        %377 = vmatpush1.msra.mxu0 0.0
        %378 = vmatprep.subr.mxu0 0.0
        %379 = vmatpush1.msra.mxu0 0.0
        %380 = vmatprep.subr.mxu0 0.0
        %381 = vmatpush1.msra.mxu0 0.0
        %382 = vmatprep.subr.mxu0 0.0
        %383 = vmatpush1.msra.mxu0 0.0
        %384 = vmatprep.subr.mxu0 0.0
        %385 = vmatpush1.msra.mxu0 0.0
        %386 = vmatprep.subr.mxu0 0.0
        %387 = vmatpush1.msra.mxu0 0.0
        %388 = vmatprep.subr.mxu0 0.0
        %389 = vmatpush1.msra.mxu0 0.0
        %390 = vmatprep.subr.mxu0 0.0
        %391 = vmatpush1.msra.mxu0 0.0
        %392 = vmatprep.mubr.f32.mxu0 0.0
        %v393 = vand.u32 %v222, 4294901760
        %394 = vmatmul.mubr.f32.gmra.mrb[0].mxu0 %v393
        %v395 = vpop.f32.mrb[0].mxu0
        %v396 = vadd.f32 %v305, %v395
        %v397 = vpop.f32.mrb[0].mxu0
        %398 = vmatprep.mubr.f32.mxu0 0.0
        %v399 = vand.u32 %v225, 4294901760
        %400 = vmatmul.mubr.f32.gmra.mrb[0].mxu0 %v399
        %v401 = vpop.f32.mrb[0].mxu0
        %v402 = vadd.f32 %v315, %v401
        %v403 = vpop.f32.mrb[0].mxu0
        %404 = vdwg.mxu0
        %405 = vmatprep.subr.mxu0 0.0
        %v406 = vand.u32 %v218, 4294901760
        %v407 = vsub.f32 %v218, %v406
        %408 = vmatpush1.msra.mxu0 %v407
        %409 = vmatprep.subr.mxu0 0.0
        %v410 = vand.u32 %v229, 4294901760
        %v411 = vsub.f32 %v229, %v410
        %412 = vmatpush1.msra.mxu0 %v411
        %413 = vmatprep.subr.mxu0 0.0
        %414 = vmatpush1.msra.mxu0 0.0
        %415 = vmatprep.subr.mxu0 0.0
        %416 = vmatpush1.msra.mxu0 0.0
        %417 = vmatprep.subr.mxu0 0.0
        %418 = vmatpush1.msra.mxu0 0.0
        %419 = vmatprep.subr.mxu0 0.0
        %420 = vmatpush1.msra.mxu0 0.0
        %421 = vmatprep.subr.mxu0 0.0
        %422 = vmatpush1.msra.mxu0 0.0
        %423 = vmatprep.subr.mxu0 0.0
        %424 = vmatpush1.msra.mxu0 0.0
        %425 = vmatprep.subr.mxu0 0.0
        %426 = vmatpush1.msra.mxu0 0.0
        %427 = vmatprep.subr.mxu0 0.0
        %428 = vmatpush1.msra.mxu0 0.0
        %429 = vmatprep.subr.mxu0 0.0
        %430 = vmatpush1.msra.mxu0 0.0
        %431 = vmatprep.subr.mxu0 0.0
        %432 = vmatpush1.msra.mxu0 0.0
        %433 = vmatprep.subr.mxu0 0.0
        %434 = vmatpush1.msra.mxu0 0.0
        %435 = vmatprep.subr.mxu0 0.0
        %436 = vmatpush1.msra.mxu0 0.0
        %437 = vmatprep.subr.mxu0 0.0
        %438 = vmatpush1.msra.mxu0 0.0
        %439 = vmatprep.subr.mxu0 0.0
        %440 = vmatpush1.msra.mxu0 0.0
        %441 = vmatprep.subr.mxu0 0.0
        %442 = vmatpush1.msra.mxu0 0.0
        %443 = vmatprep.subr.mxu0 0.0
        %444 = vmatpush1.msra.mxu0 0.0
        %445 = vmatprep.subr.mxu0 0.0
        %446 = vmatpush1.msra.mxu0 0.0
        %447 = vmatprep.subr.mxu0 0.0
        %448 = vmatpush1.msra.mxu0 0.0
        %449 = vmatprep.subr.mxu0 0.0
        %450 = vmatpush1.msra.mxu0 0.0
        %451 = vmatprep.subr.mxu0 0.0
        %452 = vmatpush1.msra.mxu0 0.0
        %453 = vmatprep.subr.mxu0 0.0
        %454 = vmatpush1.msra.mxu0 0.0
        %455 = vmatprep.subr.mxu0 0.0
        %456 = vmatpush1.msra.mxu0 0.0
        %457 = vmatprep.subr.mxu0 0.0
        %458 = vmatpush1.msra.mxu0 0.0
        %459 = vmatprep.subr.mxu0 0.0
        %460 = vmatpush1.msra.mxu0 0.0
        %461 = vmatprep.subr.mxu0 0.0
        %462 = vmatpush1.msra.mxu0 0.0
        %463 = vmatprep.subr.mxu0 0.0
        %464 = vmatpush1.msra.mxu0 0.0
        %465 = vmatprep.subr.mxu0 0.0
        %466 = vmatpush1.msra.mxu0 0.0
        %467 = vmatprep.subr.mxu0 0.0
        %468 = vmatpush1.msra.mxu0 0.0
        %469 = vmatprep.subr.mxu0 0.0
        %470 = vmatpush1.msra.mxu0 0.0
        %471 = vmatprep.subr.mxu0 0.0
        %472 = vmatpush1.msra.mxu0 0.0
        %473 = vmatprep.mubr.f32.mxu0 0.0
        %v474 = vand.u32 %v222, 4294901760
        %v475 = vsub.f32 %v222, %v474
        %476 = vmatmul.mubr.f32.gmra.mrb[0].mxu0 %v475
        %v477 = vpop.f32.mrb[0].mxu0
        %v478 = vadd.f32 %v396, %v477
        %v479 = vpop.f32.mrb[0].mxu0
        %480 = vmatprep.mubr.f32.mxu0 0.0
        %v481 = vand.u32 %v225, 4294901760
        %v482 = vsub.f32 %v225, %v481
        %483 = vmatmul.mubr.f32.gmra.mrb[0].mxu0 %v482
        %v484 = vpop.f32.mrb[0].mxu0
        %v485 = vadd.f32 %v402, %v484
        %v486 = vpop.f32.mrb[0].mxu0
        %487 = vdwg.mxu0
        %488 = vmatprep.subr.mxu0 0.0
        %v489 = vand.u32 %v218, 4294901760
        %490 = vmatpush1.msra.mxu0 %v489
        %491 = vmatprep.subr.mxu0 0.0
        %v492 = vand.u32 %v229, 4294901760
        %493 = vmatpush1.msra.mxu0 %v492
        %494 = vmatprep.subr.mxu0 0.0
        %495 = vmatpush1.msra.mxu0 0.0
        %496 = vmatprep.subr.mxu0 0.0
        %497 = vmatpush1.msra.mxu0 0.0
        %498 = vmatprep.subr.mxu0 0.0
        %499 = vmatpush1.msra.mxu0 0.0
        %500 = vmatprep.subr.mxu0 0.0
        %501 = vmatpush1.msra.mxu0 0.0
        %502 = vmatprep.subr.mxu0 0.0
        %503 = vmatpush1.msra.mxu0 0.0
        %504 = vmatprep.subr.mxu0 0.0
        %505 = vmatpush1.msra.mxu0 0.0
        %506 = vmatprep.subr.mxu0 0.0
        %507 = vmatpush1.msra.mxu0 0.0
        %508 = vmatprep.subr.mxu0 0.0
        %509 = vmatpush1.msra.mxu0 0.0
        %510 = vmatprep.subr.mxu0 0.0
        %511 = vmatpush1.msra.mxu0 0.0
        %512 = vmatprep.subr.mxu0 0.0
        %513 = vmatpush1.msra.mxu0 0.0
        %514 = vmatprep.subr.mxu0 0.0
        %515 = vmatpush1.msra.mxu0 0.0
        %516 = vmatprep.subr.mxu0 0.0
        %517 = vmatpush1.msra.mxu0 0.0
        %518 = vmatprep.subr.mxu0 0.0
        %519 = vmatpush1.msra.mxu0 0.0
        %520 = vmatprep.subr.mxu0 0.0
        %521 = vmatpush1.msra.mxu0 0.0
        %522 = vmatprep.subr.mxu0 0.0
        %523 = vmatpush1.msra.mxu0 0.0
        %524 = vmatprep.subr.mxu0 0.0
        %525 = vmatpush1.msra.mxu0 0.0
        %526 = vmatprep.subr.mxu0 0.0
        %527 = vmatpush1.msra.mxu0 0.0
        %528 = vmatprep.subr.mxu0 0.0
        %529 = vmatpush1.msra.mxu0 0.0
        %530 = vmatprep.subr.mxu0 0.0
        %531 = vmatpush1.msra.mxu0 0.0
        %532 = vmatprep.subr.mxu0 0.0
        %533 = vmatpush1.msra.mxu0 0.0
        %534 = vmatprep.subr.mxu0 0.0
        %535 = vmatpush1.msra.mxu0 0.0
        %536 = vmatprep.subr.mxu0 0.0
        %537 = vmatpush1.msra.mxu0 0.0
        %538 = vmatprep.subr.mxu0 0.0
        %539 = vmatpush1.msra.mxu0 0.0
        %540 = vmatprep.subr.mxu0 0.0
        %541 = vmatpush1.msra.mxu0 0.0
        %542 = vmatprep.subr.mxu0 0.0
        %543 = vmatpush1.msra.mxu0 0.0
        %544 = vmatprep.subr.mxu0 0.0
        %545 = vmatpush1.msra.mxu0 0.0
        %546 = vmatprep.subr.mxu0 0.0
        %547 = vmatpush1.msra.mxu0 0.0
        %548 = vmatprep.subr.mxu0 0.0
        %549 = vmatpush1.msra.mxu0 0.0
        %550 = vmatprep.subr.mxu0 0.0
        %551 = vmatpush1.msra.mxu0 0.0
        %552 = vmatprep.subr.mxu0 0.0
        %553 = vmatpush1.msra.mxu0 0.0
        %554 = vmatprep.mubr.f32.mxu0 0.0
        %v555 = vand.u32 %v222, 4294901760
        %v556 = vsub.f32 %v222, %v555
        %v557 = vand.u32 %v556, 4294901760
        %558 = vmatmul.mubr.f32.gmra.mrb[0].mxu0 %v557
        %v559 = vpop.f32.mrb[0].mxu0
        %v560 = vadd.f32 %v478, %v559
        %v561 = vpop.f32.mrb[0].mxu0
        %562 = vmatprep.mubr.f32.mxu0 0.0
        %v563 = vand.u32 %v225, 4294901760
        %v564 = vsub.f32 %v225, %v563
        %v565 = vand.u32 %v564, 4294901760
        %566 = vmatmul.mubr.f32.gmra.mrb[0].mxu0 %v565
        %v567 = vpop.f32.mrb[0].mxu0
        %v568 = vadd.f32 %v485, %v567
        %v569 = vpop.f32.mrb[0].mxu0
        %570 = vdwg.mxu0
        %571 = vmatprep.subr.mxu0 0.0
        %v572 = vand.u32 %v218, 4294901760
        %v573 = vsub.f32 %v218, %v572
        %v574 = vand.u32 %v573, 4294901760
        %575 = vmatpush1.msra.mxu0 %v574
        %576 = vmatprep.subr.mxu0 0.0
        %v577 = vand.u32 %v229, 4294901760
        %v578 = vsub.f32 %v229, %v577
        %v579 = vand.u32 %v578, 4294901760
        %580 = vmatpush1.msra.mxu0 %v579
        %581 = vmatprep.subr.mxu0 0.0
        %582 = vmatpush1.msra.mxu0 0.0
        %583 = vmatprep.subr.mxu0 0.0
        %584 = vmatpush1.msra.mxu0 0.0
        %585 = vmatprep.subr.mxu0 0.0
        %586 = vmatpush1.msra.mxu0 0.0
        %587 = vmatprep.subr.mxu0 0.0
        %588 = vmatpush1.msra.mxu0 0.0
        %589 = vmatprep.subr.mxu0 0.0
        %590 = vmatpush1.msra.mxu0 0.0
        %591 = vmatprep.subr.mxu0 0.0
        %592 = vmatpush1.msra.mxu0 0.0
        %593 = vmatprep.subr.mxu0 0.0
        %594 = vmatpush1.msra.mxu0 0.0
        %595 = vmatprep.subr.mxu0 0.0
        %596 = vmatpush1.msra.mxu0 0.0
        %597 = vmatprep.subr.mxu0 0.0
        %598 = vmatpush1.msra.mxu0 0.0
        %599 = vmatprep.subr.mxu0 0.0
        %600 = vmatpush1.msra.mxu0 0.0
        %601 = vmatprep.subr.mxu0 0.0
        %602 = vmatpush1.msra.mxu0 0.0
        %603 = vmatprep.subr.mxu0 0.0
        %604 = vmatpush1.msra.mxu0 0.0
        %605 = vmatprep.subr.mxu0 0.0
        %606 = vmatpush1.msra.mxu0 0.0
        %607 = vmatprep.subr.mxu0 0.0
        %608 = vmatpush1.msra.mxu0 0.0
        %609 = vmatprep.subr.mxu0 0.0
        %610 = vmatpush1.msra.mxu0 0.0
        %611 = vmatprep.subr.mxu0 0.0
        %612 = vmatpush1.msra.mxu0 0.0
        %613 = vmatprep.subr.mxu0 0.0
        %614 = vmatpush1.msra.mxu0 0.0
        %615 = vmatprep.subr.mxu0 0.0
        %616 = vmatpush1.msra.mxu0 0.0
        %617 = vmatprep.subr.mxu0 0.0
        %618 = vmatpush1.msra.mxu0 0.0
        %619 = vmatprep.subr.mxu0 0.0
        %620 = vmatpush1.msra.mxu0 0.0
        %621 = vmatprep.subr.mxu0 0.0
        %622 = vmatpush1.msra.mxu0 0.0
        %623 = vmatprep.subr.mxu0 0.0
        %624 = vmatpush1.msra.mxu0 0.0
        %625 = vmatprep.subr.mxu0 0.0
        %626 = vmatpush1.msra.mxu0 0.0
        %627 = vmatprep.subr.mxu0 0.0
        %628 = vmatpush1.msra.mxu0 0.0
        %629 = vmatprep.subr.mxu0 0.0
        %630 = vmatpush1.msra.mxu0 0.0
        %631 = vmatprep.subr.mxu0 0.0
        %632 = vmatpush1.msra.mxu0 0.0
        %633 = vmatprep.subr.mxu0 0.0
        %634 = vmatpush1.msra.mxu0 0.0
        %635 = vmatprep.subr.mxu0 0.0
        %636 = vmatpush1.msra.mxu0 0.0
        %637 = vmatprep.subr.mxu0 0.0
        %638 = vmatpush1.msra.mxu0 0.0
        %639 = vmatprep.subr.mxu0 0.0
        %640 = vmatpush1.msra.mxu0 0.0
        %641 = vmatprep.mubr.f32.mxu0 0.0
        %v642 = vand.u32 %v222, 4294901760
        %643 = vmatmul.mubr.f32.gmra.mrb[0].mxu0 %v642
        %v644 = vpop.f32.mrb[0].mxu0
        %v645 = vadd.f32 %v560, %v644
        %v646 = vpop.f32.mrb[0].mxu0
        %647 = vmatprep.mubr.f32.mxu0 0.0
        %v648 = vand.u32 %v225, 4294901760
        %649 = vmatmul.mubr.f32.gmra.mrb[0].mxu0 %v648
        %v650 = vpop.f32.mrb[0].mxu0
        %v651 = vadd.f32 %v568, %v650
        %v652 = vpop.f32.mrb[0].mxu0
        %653 = vdwg.mxu0
        %654 = vmatprep.subr.mxu0 0.0
        %v655 = vand.u32 %v218, 4294901760
        %656 = vmatpush1.msra.mxu0 %v655
        %657 = vmatprep.subr.mxu0 0.0
        %v658 = vand.u32 %v229, 4294901760
        %659 = vmatpush1.msra.mxu0 %v658
        %660 = vmatprep.subr.mxu0 0.0
        %661 = vmatpush1.msra.mxu0 0.0
        %662 = vmatprep.subr.mxu0 0.0
        %663 = vmatpush1.msra.mxu0 0.0
        %664 = vmatprep.subr.mxu0 0.0
        %665 = vmatpush1.msra.mxu0 0.0
        %666 = vmatprep.subr.mxu0 0.0
        %667 = vmatpush1.msra.mxu0 0.0
        %668 = vmatprep.subr.mxu0 0.0
        %669 = vmatpush1.msra.mxu0 0.0
        %670 = vmatprep.subr.mxu0 0.0
        %671 = vmatpush1.msra.mxu0 0.0
        %672 = vmatprep.subr.mxu0 0.0
        %673 = vmatpush1.msra.mxu0 0.0
        %674 = vmatprep.subr.mxu0 0.0
        %675 = vmatpush1.msra.mxu0 0.0
        %676 = vmatprep.subr.mxu0 0.0
        %677 = vmatpush1.msra.mxu0 0.0
        %678 = vmatprep.subr.mxu0 0.0
        %679 = vmatpush1.msra.mxu0 0.0
        %680 = vmatprep.subr.mxu0 0.0
        %681 = vmatpush1.msra.mxu0 0.0
        %682 = vmatprep.subr.mxu0 0.0
        %683 = vmatpush1.msra.mxu0 0.0
        %684 = vmatprep.subr.mxu0 0.0
        %685 = vmatpush1.msra.mxu0 0.0
        %686 = vmatprep.subr.mxu0 0.0
        %687 = vmatpush1.msra.mxu0 0.0
        %688 = vmatprep.subr.mxu0 0.0
        %689 = vmatpush1.msra.mxu0 0.0
        %690 = vmatprep.subr.mxu0 0.0
        %691 = vmatpush1.msra.mxu0 0.0
        %692 = vmatprep.subr.mxu0 0.0
        %693 = vmatpush1.msra.mxu0 0.0
        %694 = vmatprep.subr.mxu0 0.0
        %695 = vmatpush1.msra.mxu0 0.0
        %696 = vmatprep.subr.mxu0 0.0
        %697 = vmatpush1.msra.mxu0 0.0
        %698 = vmatprep.subr.mxu0 0.0
        %699 = vmatpush1.msra.mxu0 0.0
        %700 = vmatprep.subr.mxu0 0.0
        %701 = vmatpush1.msra.mxu0 0.0
        %702 = vmatprep.subr.mxu0 0.0
        %703 = vmatpush1.msra.mxu0 0.0
        %704 = vmatprep.subr.mxu0 0.0
        %705 = vmatpush1.msra.mxu0 0.0
        %706 = vmatprep.subr.mxu0 0.0
        %707 = vmatpush1.msra.mxu0 0.0
        %708 = vmatprep.subr.mxu0 0.0
        %709 = vmatpush1.msra.mxu0 0.0
        %710 = vmatprep.subr.mxu0 0.0
        %711 = vmatpush1.msra.mxu0 0.0
        %712 = vmatprep.subr.mxu0 0.0
        %713 = vmatpush1.msra.mxu0 0.0
        %714 = vmatprep.subr.mxu0 0.0
        %715 = vmatpush1.msra.mxu0 0.0
        %716 = vmatprep.subr.mxu0 0.0
        %717 = vmatpush1.msra.mxu0 0.0
        %718 = vmatprep.subr.mxu0 0.0
        %719 = vmatpush1.msra.mxu0 0.0
        %720 = vmatprep.mubr.f32.mxu0 0.0
        %v721 = vand.u32 %v222, 4294901760
        %722 = vmatmul.mubr.f32.gmra.mrb[0].mxu0 %v721
        %v723 = vpop.f32.mrb[0].mxu0
        %v724 = vadd.f32 %v645, %v723
        %v725 = vpop.f32.mrb[0].mxu0
        %726 = vmatprep.mubr.f32.mxu0 0.0
        %v727 = vand.u32 %v225, 4294901760
        %728 = vmatmul.mubr.f32.gmra.mrb[0].mxu0 %v727
        %v729 = vpop.f32.mrb[0].mxu0
        %v730 = vadd.f32 %v651, %v729
        %v731 = vpop.f32.mrb[0].mxu0
        %732 = vdwg.mxu0
        %v733 = vand.u32 2147483647, %v724
        %vm734 = vcmp.le.f32.partialorder %v733, 0.7853982
        %vm735 = vcmp.lt.s32.totalorder %v724, 0
        %v736 = vand.u32 %v724, 2139095040
        %v737 = vshrl.u32 %v736, 23
        %v738 = vsub.s32 %v737, 127
        %v739 = vand.u32 2147483647, %v724
        %v740 = vand.u32 %v739, 8388607
        %v741 = vor.u32 %v740, 8388608
        %v742 = vsub.s32 0, %v741
        %v743 = vadd.s32 %v738, 1
        %vm744 = vcmp.gt.s32.totalorder %v743, 0
        %v745 = vsel %vm744, %v743, 0
        %v746 = vshrl.u32 %v745, 5
        %v747 = vand.u32 %v745, 31
        %v748 = vsub.s32 32, %v747
        %v749 = vshrl.u32 683565275, %v748
        %v750 = vshll.u32 683565275, %v747
        %v751 = vshrl.u32 2475754826, %v748
        %v752 = vor.u32 %v750, %v751
        %v753 = vshll.u32 2475754826, %v747
        %v754 = vshrl.u32 2131351028, %v748
        %v755 = vor.u32 %v753, %v754
        %v756 = vshll.u32 2131351028, %v747
        %v757 = vshrl.u32 2102212464, %v748
        %v758 = vor.u32 %v756, %v757
        %v759 = vshll.u32 2102212464, %v747
        %v760 = vshrl.u32 920167782, %v748
        %v761 = vor.u32 %v759, %v760
        %v762 = vshll.u32 920167782, %v747
        %v763 = vshrl.u32 1326507024, %v748
        %v764 = vor.u32 %v762, %v763
        %vm765 = vcmp.lt.s32.totalorder %v746, 1
        %vm766 = vcmp.lt.s32.totalorder %v746, 2
        %vm767 = vcmp.lt.s32.totalorder %v746, 3
        %vm768 = vcmp.lt.s32.totalorder %v746, 4
        %v769 = vsel %vm765, %v749, %v752
        %v770 = vsel %vm768, %v758, 2102212464
        %v771 = vsel %vm767, %v755, %v770
        %v772 = vsel %vm766, %v769, %v771
        %v773 = vsel %vm765, %v752, %v755
        %v774 = vsel %vm768, %v761, 920167782
        %v775 = vsel %vm767, %v758, %v774
        %v776 = vsel %vm766, %v773, %v775
        %v777 = vsel %vm765, %v755, %v758
        %v778 = vsel %vm768, %v764, 1326507024
        %v779 = vsel %vm767, %v761, %v778
        %v780 = vsel %vm766, %v777, %v779
        %v781 = vshll.u32 %v741, 8
        %v782 = vmul.u32.u64.compose %v781, %v780
        %v783 = vextract.low.u32 %v782
        %v784 = vextract.high.u32 %v782
        %v785 = vmul.u32.u64.compose %v781, %v776
        %v786 = vextract.low.u32 %v785
        %v787 = vextract.high.u32 %v785
        %v788 = vmul.u32 %v781, %v772
        %v789 = vadd.s32 %v784, %v786
        %vm790 = vc.u32 %v784, %v786
        %v791 = vadd.s32 %v787, 1
        %v792 = vsel %vm790, %v791, %v787
        %v793 = vadd.s32 %v788, %v792
        %v794 = vadd.s32 %v793, 536870912
        %v795 = vshrl.u32 %v794, 30
        %v796 = vshll.u32 %v795, 30
        %v797 = vsub.s32 %v793, %v796
        %vm798 = vcmp.lt.s32.totalorder %v797, 0
        %v799 = vsub.s32 0, %v797
        %v800 = vsel %vm798, %v799, %v797
        %v801 = vclz %v800
        %v802 = vsub.s32 %v801, 2
        %vm803 = vcmp.gt.s32.totalorder 0, %v802
        %v804 = vsel %vm803, 0, %v802
        %v805 = vsub.s32 32, %v804
        %v806 = vshll.u32 %v797, %v804
        %v807 = vshrl.u32 %v789, %v805
        %v808 = vor.u32 %v806, %v807
        %v809 = vsub.s32 4294967266, %v804
        %v810 = vadd.s32 %v809, 127
        %v811 = vshll.u32 %v810, 23
        %v812 = vor.u32 4788187, %v811
        %v813 = vand.u32 2147483647, %v812
        %v815 = vcvt.s32.f32 %v808
        %v816 = vmul.f32 %v815, %v813
        %v817 = vxor.u32 %v816, 2147483648
        %v818 = vsel %vm735, %v817, %v816
        %v819 = vsub.s32 4, %v795
        %v820 = vsel %vm735, %v819, %v795
        %v821 = vsel %vm734, %v724, %v818
        %v822 = vsel %vm734, 0, %v820
        %v823 = vcosq.f32.pop %v821
        %v824 = vsinq.f32.pop %v821
        %vm825 = vweird.f32 %v724
        %v826 = vand.u32 %v822, 3
        %vm827 = vcmp.lt.s32.totalorder %v826, 2
        %vm828 = vcmp.eq.s32.totalorder %v826, 0
        %v829 = vxor.u32 %v824, 2147483648
        %v830 = vsel %vm828, %v823, %v829
        %vm831 = vcmp.eq.s32.totalorder %v826, 2
        %v832 = vxor.u32 %v823, 2147483648
        %v833 = vsel %vm831, %v832, %v824
        %v834 = vsel %vm827, %v830, %v833
        %v835 = vsel %vm825, nan, %v834
        %v836 = vand.u32 2147483647, %v730
        %vm837 = vcmp.le.f32.partialorder %v836, 0.7853982
        %vm838 = vcmp.lt.s32.totalorder %v730, 0
        %v839 = vand.u32 %v730, 2139095040
        %v840 = vshrl.u32 %v839, 23
        %v841 = vsub.s32 %v840, 127
        %v842 = vand.u32 2147483647, %v730
        %v843 = vand.u32 %v842, 8388607
        %v844 = vor.u32 %v843, 8388608
        %v845 = vsub.s32 0, %v844
        %v846 = vadd.s32 %v841, 1
        %vm847 = vcmp.gt.s32.totalorder %v846, 0
        %v848 = vsel %vm847, %v846, 0
        %v849 = vshrl.u32 %v848, 5
        %v850 = vand.u32 %v848, 31
        %v851 = vsub.s32 32, %v850
        %v852 = vshrl.u32 683565275, %v851
        %v853 = vshll.u32 683565275, %v850
        %v854 = vshrl.u32 2475754826, %v851
        %v855 = vor.u32 %v853, %v854
        %v856 = vshll.u32 2475754826, %v850
        %v857 = vshrl.u32 2131351028, %v851
        %v858 = vor.u32 %v856, %v857
        %v859 = vshll.u32 2131351028, %v850
        %v860 = vshrl.u32 2102212464, %v851
        %v861 = vor.u32 %v859, %v860
        %v862 = vshll.u32 2102212464, %v850
        %v863 = vshrl.u32 920167782, %v851
        %v864 = vor.u32 %v862, %v863
        %v865 = vshll.u32 920167782, %v850
        %v866 = vshrl.u32 1326507024, %v851
        %v867 = vor.u32 %v865, %v866
        %vm868 = vcmp.lt.s32.totalorder %v849, 1
        %vm869 = vcmp.lt.s32.totalorder %v849, 2
        %vm870 = vcmp.lt.s32.totalorder %v849, 3
        %vm871 = vcmp.lt.s32.totalorder %v849, 4
        %v872 = vsel %vm868, %v852, %v855
        %v873 = vsel %vm871, %v861, 2102212464
        %v874 = vsel %vm870, %v858, %v873
        %v875 = vsel %vm869, %v872, %v874
        %v876 = vsel %vm868, %v855, %v858
        %v877 = vsel %vm871, %v864, 920167782
        %v878 = vsel %vm870, %v861, %v877
        %v879 = vsel %vm869, %v876, %v878
        %v880 = vsel %vm868, %v858, %v861
        %v881 = vsel %vm871, %v867, 1326507024
        %v882 = vsel %vm870, %v864, %v881
        %v883 = vsel %vm869, %v880, %v882
        %v884 = vshll.u32 %v844, 8
        %v885 = vmul.u32.u64.compose %v884, %v883
        %v886 = vextract.low.u32 %v885
        %v887 = vextract.high.u32 %v885
        %v888 = vmul.u32.u64.compose %v884, %v879
        %v889 = vextract.low.u32 %v888
        %v890 = vextract.high.u32 %v888
        %v891 = vmul.u32 %v884, %v875
        %v892 = vadd.s32 %v887, %v889
        %vm893 = vc.u32 %v887, %v889
        %v894 = vadd.s32 %v890, 1
        %v895 = vsel %vm893, %v894, %v890
        %v896 = vadd.s32 %v891, %v895
        %v897 = vadd.s32 %v896, 536870912
        %v898 = vshrl.u32 %v897, 30
        %v899 = vshll.u32 %v898, 30
        %v900 = vsub.s32 %v896, %v899
        %vm901 = vcmp.lt.s32.totalorder %v900, 0
        %v902 = vsub.s32 0, %v900
        %v903 = vsel %vm901, %v902, %v900
        %v904 = vclz %v903
        %v905 = vsub.s32 %v904, 2
        %vm906 = vcmp.gt.s32.totalorder 0, %v905
        %v907 = vsel %vm906, 0, %v905
        %v908 = vsub.s32 32, %v907
        %v909 = vshll.u32 %v900, %v907
        %v910 = vshrl.u32 %v892, %v908
        %v911 = vor.u32 %v909, %v910
        %v912 = vsub.s32 4294967266, %v907
        %v913 = vadd.s32 %v912, 127
        %v914 = vshll.u32 %v913, 23
        %v915 = vor.u32 4788187, %v914
        %v916 = vand.u32 2147483647, %v915
        %v918 = vcvt.s32.f32 %v911
        %v919 = vmul.f32 %v918, %v916
        %v920 = vxor.u32 %v919, 2147483648
        %v921 = vsel %vm838, %v920, %v919
        %v922 = vsub.s32 4, %v898
        %v923 = vsel %vm838, %v922, %v898
        %v924 = vsel %vm837, %v730, %v921
        %v925 = vsel %vm837, 0, %v923
        %v926 = vcosq.f32.pop %v924
        %v927 = vsinq.f32.pop %v924
        %vm928 = vweird.f32 %v730
        %v929 = vand.u32 %v925, 3
        %vm930 = vcmp.lt.s32.totalorder %v929, 2
        %vm931 = vcmp.eq.s32.totalorder %v929, 0
        %v932 = vxor.u32 %v927, 2147483648
        %v933 = vsel %vm931, %v926, %v932
        %vm934 = vcmp.eq.s32.totalorder %v929, 2
        %v935 = vxor.u32 %v926, 2147483648
        %v936 = vsel %vm934, %v935, %v927
        %v937 = vsel %vm930, %v933, %v936
        %v938 = vsel %vm928, nan, %v937
        %939 = vst [vmem:[%s194] sm:$0xff] %v835
        %940 = vst [vmem:[%s194 + $0x8] sm:$0xff] %v938
        %v941 = vand.u32 2147483647, %v724
        %vm942 = vcmp.le.f32.partialorder %v941, 0.7853982
        %vm943 = vcmp.lt.s32.totalorder %v724, 0
        %v944 = vand.u32 %v724, 2139095040
        %v945 = vshrl.u32 %v944, 23
        %v946 = vsub.s32 %v945, 127
        %v947 = vand.u32 2147483647, %v724
        %v948 = vand.u32 %v947, 8388607
        %v949 = vor.u32 %v948, 8388608
        %v950 = vsub.s32 0, %v949
        %v951 = vadd.s32 %v946, 1
        %vm952 = vcmp.gt.s32.totalorder %v951, 0
        %v953 = vsel %vm952, %v951, 0
        %v954 = vshrl.u32 %v953, 5
        %v955 = vand.u32 %v953, 31
        %v956 = vsub.s32 32, %v955
        %v957 = vshrl.u32 683565275, %v956
        %v958 = vshll.u32 683565275, %v955
        %v959 = vshrl.u32 2475754826, %v956
        %v960 = vor.u32 %v958, %v959
        %v961 = vshll.u32 2475754826, %v955
        %v962 = vshrl.u32 2131351028, %v956
        %v963 = vor.u32 %v961, %v962
        %v964 = vshll.u32 2131351028, %v955
        %v965 = vshrl.u32 2102212464, %v956
        %v966 = vor.u32 %v964, %v965
        %v967 = vshll.u32 2102212464, %v955
        %v968 = vshrl.u32 920167782, %v956
        %v969 = vor.u32 %v967, %v968
        %v970 = vshll.u32 920167782, %v955
        %v971 = vshrl.u32 1326507024, %v956
        %v972 = vor.u32 %v970, %v971
        %vm973 = vcmp.lt.s32.totalorder %v954, 1
        %vm974 = vcmp.lt.s32.totalorder %v954, 2
        %vm975 = vcmp.lt.s32.totalorder %v954, 3
        %vm976 = vcmp.lt.s32.totalorder %v954, 4
        %v977 = vsel %vm973, %v957, %v960
        %v978 = vsel %vm976, %v966, 2102212464
        %v979 = vsel %vm975, %v963, %v978
        %v980 = vsel %vm974, %v977, %v979
        %v981 = vsel %vm973, %v960, %v963
        %v982 = vsel %vm976, %v969, 920167782
        %v983 = vsel %vm975, %v966, %v982
        %v984 = vsel %vm974, %v981, %v983
        %v985 = vsel %vm973, %v963, %v966
        %v986 = vsel %vm976, %v972, 1326507024
        %v987 = vsel %vm975, %v969, %v986
        %v988 = vsel %vm974, %v985, %v987
        %v989 = vshll.u32 %v949, 8
        %v990 = vmul.u32.u64.compose %v989, %v988
        %v991 = vextract.low.u32 %v990
        %v992 = vextract.high.u32 %v990
        %v993 = vmul.u32.u64.compose %v989, %v984
        %v994 = vextract.low.u32 %v993
        %v995 = vextract.high.u32 %v993
        %v996 = vmul.u32 %v989, %v980
        %v997 = vadd.s32 %v992, %v994
        %vm998 = vc.u32 %v992, %v994
        %v999 = vadd.s32 %v995, 1
        %v1000 = vsel %vm998, %v999, %v995
        %v1001 = vadd.s32 %v996, %v1000
        %v1002 = vadd.s32 %v1001, 536870912
        %v1003 = vshrl.u32 %v1002, 30
        %v1004 = vshll.u32 %v1003, 30
        %v1005 = vsub.s32 %v1001, %v1004
        %vm1006 = vcmp.lt.s32.totalorder %v1005, 0
        %v1007 = vsub.s32 0, %v1005
        %v1008 = vsel %vm1006, %v1007, %v1005
        %v1009 = vclz %v1008
        %v1010 = vsub.s32 %v1009, 2
        %vm1011 = vcmp.gt.s32.totalorder 0, %v1010
        %v1012 = vsel %vm1011, 0, %v1010
        %v1013 = vsub.s32 32, %v1012
        %v1014 = vshll.u32 %v1005, %v1012
        %v1015 = vshrl.u32 %v997, %v1013
        %v1016 = vor.u32 %v1014, %v1015
        %v1017 = vsub.s32 4294967266, %v1012
        %v1018 = vadd.s32 %v1017, 127
        %v1019 = vshll.u32 %v1018, 23
        %v1020 = vor.u32 4788187, %v1019
        %v1021 = vand.u32 2147483647, %v1020
        %v1023 = vcvt.s32.f32 %v1016
        %v1024 = vmul.f32 %v1023, %v1021
        %v1025 = vxor.u32 %v1024, 2147483648
        %v1026 = vsel %vm943, %v1025, %v1024
        %v1027 = vsub.s32 4, %v1003
        %v1028 = vsel %vm943, %v1027, %v1003
        %v1029 = vsel %vm942, %v724, %v1026
        %v1030 = vsel %vm942, 0, %v1028
        %v1031 = vcosq.f32.pop %v1029
        %v1032 = vsinq.f32.pop %v1029
        %vm1033 = vweird.f32 %v724
        %v1034 = vadd.s32 %v1030, 3
        %v1035 = vand.u32 %v1034, 3
        %vm1036 = vcmp.lt.s32.totalorder %v1035, 2
        %vm1037 = vcmp.eq.s32.totalorder %v1035, 0
        %v1038 = vxor.u32 %v1032, 2147483648
        %v1039 = vsel %vm1037, %v1031, %v1038
        %vm1040 = vcmp.eq.s32.totalorder %v1035, 2
        %v1041 = vxor.u32 %v1031, 2147483648
        %v1042 = vsel %vm1040, %v1041, %v1032
        %v1043 = vsel %vm1036, %v1039, %v1042
        %v1044 = vsel %vm1033, nan, %v1043
        %v1045 = vand.u32 2147483647, %v730
        %vm1046 = vcmp.le.f32.partialorder %v1045, 0.7853982
        %vm1047 = vcmp.lt.s32.totalorder %v730, 0
        %v1048 = vand.u32 %v730, 2139095040
        %v1049 = vshrl.u32 %v1048, 23
        %v1050 = vsub.s32 %v1049, 127
        %v1051 = vand.u32 2147483647, %v730
        %v1052 = vand.u32 %v1051, 8388607
        %v1053 = vor.u32 %v1052, 8388608
        %v1054 = vsub.s32 0, %v1053
        %v1055 = vadd.s32 %v1050, 1
        %vm1056 = vcmp.gt.s32.totalorder %v1055, 0
        %v1057 = vsel %vm1056, %v1055, 0
        %v1058 = vshrl.u32 %v1057, 5
        %v1059 = vand.u32 %v1057, 31
        %v1060 = vsub.s32 32, %v1059
        %v1061 = vshrl.u32 683565275, %v1060
        %v1062 = vshll.u32 683565275, %v1059
        %v1063 = vshrl.u32 2475754826, %v1060
        %v1064 = vor.u32 %v1062, %v1063
        %v1065 = vshll.u32 2475754826, %v1059
        %v1066 = vshrl.u32 2131351028, %v1060
        %v1067 = vor.u32 %v1065, %v1066
        %v1068 = vshll.u32 2131351028, %v1059
        %v1069 = vshrl.u32 2102212464, %v1060
        %v1070 = vor.u32 %v1068, %v1069
        %v1071 = vshll.u32 2102212464, %v1059
        %v1072 = vshrl.u32 920167782, %v1060
        %v1073 = vor.u32 %v1071, %v1072
        %v1074 = vshll.u32 920167782, %v1059
        %v1075 = vshrl.u32 1326507024, %v1060
        %v1076 = vor.u32 %v1074, %v1075
        %vm1077 = vcmp.lt.s32.totalorder %v1058, 1
        %vm1078 = vcmp.lt.s32.totalorder %v1058, 2
        %vm1079 = vcmp.lt.s32.totalorder %v1058, 3
        %vm1080 = vcmp.lt.s32.totalorder %v1058, 4
        %v1081 = vsel %vm1077, %v1061, %v1064
        %v1082 = vsel %vm1080, %v1070, 2102212464
        %v1083 = vsel %vm1079, %v1067, %v1082
        %v1084 = vsel %vm1078, %v1081, %v1083
        %v1085 = vsel %vm1077, %v1064, %v1067
        %v1086 = vsel %vm1080, %v1073, 920167782
        %v1087 = vsel %vm1079, %v1070, %v1086
        %v1088 = vsel %vm1078, %v1085, %v1087
        %v1089 = vsel %vm1077, %v1067, %v1070
        %v1090 = vsel %vm1080, %v1076, 1326507024
        %v1091 = vsel %vm1079, %v1073, %v1090
        %v1092 = vsel %vm1078, %v1089, %v1091
        %v1093 = vshll.u32 %v1053, 8
        %v1094 = vmul.u32.u64.compose %v1093, %v1092
        %v1095 = vextract.low.u32 %v1094
        %v1096 = vextract.high.u32 %v1094
        %v1097 = vmul.u32.u64.compose %v1093, %v1088
        %v1098 = vextract.low.u32 %v1097
        %v1099 = vextract.high.u32 %v1097
        %v1100 = vmul.u32 %v1093, %v1084
        %v1101 = vadd.s32 %v1096, %v1098
        %vm1102 = vc.u32 %v1096, %v1098
        %v1103 = vadd.s32 %v1099, 1
        %v1104 = vsel %vm1102, %v1103, %v1099
        %v1105 = vadd.s32 %v1100, %v1104
        %v1106 = vadd.s32 %v1105, 536870912
        %v1107 = vshrl.u32 %v1106, 30
        %v1108 = vshll.u32 %v1107, 30
        %v1109 = vsub.s32 %v1105, %v1108
        %vm1110 = vcmp.lt.s32.totalorder %v1109, 0
        %v1111 = vsub.s32 0, %v1109
        %v1112 = vsel %vm1110, %v1111, %v1109
        %v1113 = vclz %v1112
        %v1114 = vsub.s32 %v1113, 2
        %vm1115 = vcmp.gt.s32.totalorder 0, %v1114
        %v1116 = vsel %vm1115, 0, %v1114
        %v1117 = vsub.s32 32, %v1116
        %v1118 = vshll.u32 %v1109, %v1116
        %v1119 = vshrl.u32 %v1101, %v1117
        %v1120 = vor.u32 %v1118, %v1119
        %v1121 = vsub.s32 4294967266, %v1116
        %v1122 = vadd.s32 %v1121, 127
        %v1123 = vshll.u32 %v1122, 23
        %v1124 = vor.u32 4788187, %v1123
        %v1125 = vand.u32 2147483647, %v1124
        %v1127 = vcvt.s32.f32 %v1120
        %v1128 = vmul.f32 %v1127, %v1125
        %v1129 = vxor.u32 %v1128, 2147483648
        %v1130 = vsel %vm1047, %v1129, %v1128
        %v1131 = vsub.s32 4, %v1107
        %v1132 = vsel %vm1047, %v1131, %v1107
        %v1133 = vsel %vm1046, %v730, %v1130
        %v1134 = vsel %vm1046, 0, %v1132
        %v1135 = vcosq.f32.pop %v1133
        %v1136 = vsinq.f32.pop %v1133
        %vm1137 = vweird.f32 %v730
        %v1138 = vadd.s32 %v1134, 3
        %v1139 = vand.u32 %v1138, 3
        %vm1140 = vcmp.lt.s32.totalorder %v1139, 2
        %vm1141 = vcmp.eq.s32.totalorder %v1139, 0
        %v1142 = vxor.u32 %v1136, 2147483648
        %v1143 = vsel %vm1141, %v1135, %v1142
        %vm1144 = vcmp.eq.s32.totalorder %v1139, 2
        %v1145 = vxor.u32 %v1135, 2147483648
        %v1146 = vsel %vm1144, %v1145, %v1136
        %v1147 = vsel %vm1140, %v1143, %v1146
        %v1148 = vsel %vm1137, nan, %v1147
        %1149 = vst [vmem:[%s201] sm:$0xff] %v1044
        %1150 = vst [vmem:[%s201 + $0x8] sm:$0xff] %v1148
        %s1151 = sand.u32 %s92, 1
        %s1152 = scalar_lea.sflag [#allocation3], %s1151
        %s1153 = sand.u32 %s92, 1
        %s1154 = smul.addr %s1153, 16
        %s1155 = scalar_lea.vmem [#allocation2], %s1154
        %s1156 = sand.u32 %s120, 1
        %s1157 = scalar_lea.sflag [#allocation5], %s1156
        %s1158 = sand.u32 %s120, 1
        %s1159 = smul.addr %s1158, 16
        %s1160 = scalar_lea.vmem [#allocation4], %s1159
        // Predicated region
        $region29: #{tpu_custom_call.1} parent=27 // pred_check
          %p1161 = pneg %p102
        $region30: #{tpu_custom_call.1} parent=27 // pred_check_branch
          %1163 = sbr.rel (%p1161) target = $region32
        $region31: #{tpu_custom_call.1} parent=27 // pred_region
          %s1164 = smul.u32 2, %s26
          %s1166 = ssub.s32 256, 256
          %1167 = vsyncadd %s1152, %s1166
          %s1168 = smul.addr %s25, 2
          %s1169 = sadd.s32 %s1164, %s1168
          %s1170 = smul.addr %s1169, 128
          %s1171 = scalar_lea.hbm %s2, %s1170
          %s1172 = sshll.u32 %s1155, 4
          %s1173 = int_to_ptr.vmem [resolvable:$true] %s1172
          %1178 = dma.vmem_to_hbm [thread:$0]  %s1173, 256, %s1171, %s1152, 128, 128, 8
        $region32: #{tpu_custom_call.1} parent=27 // pred_fallthru
          _
        // Predicated region
        $region33: #{tpu_custom_call.1} parent=27 // pred_check
          %p1179 = pneg %p130
        $region34: #{tpu_custom_call.1} parent=27 // pred_check_branch
          %1181 = sbr.rel (%p1179) target = $region36
        $region35: #{tpu_custom_call.1} parent=27 // pred_region
          %s1182 = smul.u32 2, %s26
          %s1184 = ssub.s32 256, 256
          %1185 = vsyncadd %s1157, %s1184
          %s1186 = smul.addr %s25, 2
          %s1187 = sadd.s32 %s1182, %s1186
          %s1188 = smul.addr %s1187, 128
          %s1189 = scalar_lea.hbm %s3, %s1188
          %s1190 = sshll.u32 %s1160, 4
          %s1191 = int_to_ptr.vmem [resolvable:$true] %s1190
          %1196 = dma.vmem_to_hbm [thread:$0]  %s1191, 256, %s1189, %s1157, 128, 128, 8
        $region36: #{tpu_custom_call.1} parent=27 // pred_fallthru
          _
      $region28: #{tpu_custom_call.1} parent=5 // pred_fallthru
        _
      %p1197 = scmp.le.s32.totalorder 2, %s16
      // Predicated region
      $region37: #{tpu_custom_call.1} parent=5 // pred_check
        %p1198 = pneg %p1197
      $region38: #{tpu_custom_call.1} parent=5 // pred_check_branch
        %1200 = sbr.rel (%p1198) target = $region40
      $region39: #{tpu_custom_call.1} parent=5 // pred_region
        %s1201 = ssub.s32 %s16, 2
        // Predicated region
        $region41: #{tpu_custom_call.1} parent=39 // pred_check
          %p1202 = pneg %p108
        $region42: #{tpu_custom_call.1} parent=39 // pred_check_branch
          %1204 = sbr.rel (%p1202) target = $region44
        $region43: #{tpu_custom_call.1} parent=39 // pred_region
          %s1205 = sand.u32 %s93, 1
          %s1206 = scalar_lea.sflag [#allocation3], %s1205
          %s1207 = sand.u32 %s93, 1
          %s1208 = smul.addr %s1207, 16
          %s1209 = scalar_lea.vmem [#allocation2], %s1208
          %1210 = dma.done %s1206, 256
        $region44: #{tpu_custom_call.1} parent=39 // pred_fallthru
          _
        // Predicated region
        $region45: #{tpu_custom_call.1} parent=39 // pred_check
          %p1211 = pneg %p136
        $region46: #{tpu_custom_call.1} parent=39 // pred_check_branch
          %1213 = sbr.rel (%p1211) target = $region48
        $region47: #{tpu_custom_call.1} parent=39 // pred_region
          %s1214 = sand.u32 %s121, 1
          %s1215 = scalar_lea.sflag [#allocation5], %s1214
          %s1216 = sand.u32 %s121, 1
          %s1217 = smul.addr %s1216, 16
          %s1218 = scalar_lea.vmem [#allocation4], %s1217
          %1219 = dma.done %s1215, 256
        $region48: #{tpu_custom_call.1} parent=39 // pred_fallthru
          _
      $region40: #{tpu_custom_call.1} parent=5 // pred_fallthru
        _
    $region6: #{tpu_custom_call.1} parent=1 // loop_footer
      %s20 = sadd.s32 1, %s16
    $region7: #{tpu_custom_call.1} parent=1 // loop_footer_branch
      %15 = sbr.rel target = $region3
    $region8: #{tpu_custom_call.1} parent=1 // loop_exit
      _
    %1220 = vsyncpa [#allocation3], 1
    %s1221 = scalar_lea.sflag [#allocation3], 1
    %1222 = vsyncpa %s1221, 1
    %1223 = vsyncpa [#allocation5], 1
    %s1224 = scalar_lea.sflag [#allocation5], 1
    %1225 = vsyncpa %s1224, 1

</llo_original>
